<compile_context>
chip_gen: v7x
topology: tpu7x:2x2x1
jax: 0.10.0
libtpu: 0.0.40
codegen_flags: <defaults>
</compile_context>

<pallas_src>
import functools
import math

import jax
import jax.numpy as jnp
from jax.experimental import pallas as pl
from jax.experimental.pallas import tpu as pltpu

_EPS = 1e-8  # PyTorch nn.CosineSimilarity default eps


# ---------------------------------------------------------------------------
# Kernels
# ---------------------------------------------------------------------------
def _cos_matrix_kernel(z1_ref, z2_ref, o_ref, *, inv_temp, inv_eps):
    """z1_ref: (tm, H), z2_ref: (tn, H)  ->  o_ref: (tm, tn) = cos(z1, z2)/temp."""
    a = z1_ref[...].astype(jnp.float32)
    b = z2_ref[...].astype(jnp.float32)
    # 1 / max(||v||, eps) == min(rsqrt(||v||^2), 1/eps)  (EUP rsqrt, no divide).
    inv_na = jnp.minimum(jax.lax.rsqrt(jnp.sum(a * a, axis=-1, keepdims=True)), inv_eps)
    inv_nb = jnp.minimum(jax.lax.rsqrt(jnp.sum(b * b, axis=-1, keepdims=True)), inv_eps)
    an = a * inv_na
    bn = b * inv_nb
    # Contract the H axis of both operands on the MXU, accumulate in f32.
    sim = jax.lax.dot_general(
        an, bn, (((1,), (1,)), ((), ())), preferred_element_type=jnp.float32
    )
    o_ref[...] = sim * inv_temp


def _cos_rows_kernel(x_ref, y_ref, o_ref, *, inv_temp, inv_eps):
    """x_ref, y_ref: (tm, H)  ->  o_ref: (tm, 1) row-wise cosine / temp."""
    x = x_ref[...].astype(jnp.float32)
    y = y_ref[...].astype(jnp.float32)
    dot = jnp.sum(x * y, axis=-1, keepdims=True)
    inv_nx = jnp.minimum(jax.lax.rsqrt(jnp.sum(x * x, axis=-1, keepdims=True)), inv_eps)
    inv_ny = jnp.minimum(jax.lax.rsqrt(jnp.sum(y * y, axis=-1, keepdims=True)), inv_eps)
    # NOTE: output kept (tm, 1); a lane-dense (1, tm) variant would need an
    # in-kernel transpose — output bytes here are tiny next to the input reads.
    o_ref[...] = dot * inv_nx * inv_ny * inv_temp


# ---------------------------------------------------------------------------
# Tile-size heuristics (legal on v5e / v6e / v7x; conservative VMEM budgets)
# ---------------------------------------------------------------------------
def _pick_row_tile(M, H, itemsize):
    """Largest row tile (<=512) whose double-buffered inputs stay well in VMEM."""
    budget = 4 << 20  # bytes per input tile; x2 inputs x2 pipeline buffers ~16 MiB
    cap = max(8, budget // max(1, H * itemsize))
    tm = min(512, cap)
    tm -= tm % 8
    if tm >= M:
        return M  # single full-extent block (always layout-legal)
    return max(tm, 8)


def _pick_mm_tiles(A, B, H, itemsize):
    """MXU-friendly (128/256-aligned) tiles; shrink if H is very large."""
    tm, tn = 256, 256
    while H * (tm + tn) * itemsize * 2 > (16 << 20) and tm > 8:
        tm = max(8, tm // 2)
        tn = max(128, tn // 2)
    if tm >= A:
        tm = A  # full-extent block
    if tn >= B:
        tn = B  # full-extent block
    return tm, tn


# ---------------------------------------------------------------------------
# Pallas-call wrappers
# ---------------------------------------------------------------------------
def _cosine_similarity_matrix(z1, z2, temp):
    """z1: (A, H), z2: (B, H)  ->  (A, B) cosine-similarity / temp (MXU path)."""
    A, H = z1.shape
    B, H2 = z2.shape
    assert H == H2
    itemsize = max(jnp.dtype(z1.dtype).itemsize, jnp.dtype(z2.dtype).itemsize)
    tm, tn = _pick_mm_tiles(A, B, H, itemsize)

    kernel = functools.partial(
        _cos_matrix_kernel, inv_temp=1.0 / float(temp), inv_eps=1.0 / _EPS
    )
    return pl.pallas_call(
        kernel,
        out_shape=jax.ShapeDtypeStruct((A, B), jnp.float32),
        grid_spec=pltpu.PrefetchScalarGridSpec(
            num_scalar_prefetch=0,
            grid=(pl.cdiv(A, tm), pl.cdiv(B, tn)),
            in_specs=[
                pl.BlockSpec((tm, H), lambda i, j: (i, 0)),
                pl.BlockSpec((tn, H), lambda i, j: (j, 0)),
            ],
            out_specs=pl.BlockSpec((tm, tn), lambda i, j: (i, j)),
        ),
        compiler_params=pltpu.CompilerParams(
            dimension_semantics=("parallel", "parallel"),
        ),
    )(z1, z2)


def _cosine_similarity_rows(x2d, y2d, temp):
    """x2d, y2d: (M, H) (original dtype)  ->  (M,) cosine-similarity / temp."""
    M, H = x2d.shape
    itemsize = max(jnp.dtype(x2d.dtype).itemsize, jnp.dtype(y2d.dtype).itemsize)
    tm = _pick_row_tile(M, H, itemsize)

    kernel = functools.partial(
        _cos_rows_kernel, inv_temp=1.0 / float(temp), inv_eps=1.0 / _EPS
    )
    out = pl.pallas_call(
        kernel,
        out_shape=jax.ShapeDtypeStruct((M, 1), jnp.float32),
        grid_spec=pltpu.PrefetchScalarGridSpec(
            num_scalar_prefetch=0,
            grid=(pl.cdiv(M, tm),),
            in_specs=[
                pl.BlockSpec((tm, H), lambda i: (i, 0)),
                pl.BlockSpec((tm, H), lambda i: (i, 0)),
            ],
            out_specs=pl.BlockSpec((tm, 1), lambda i: (i, 0)),
        ),
        compiler_params=pltpu.CompilerParams(
            dimension_semantics=("parallel",),
        ),
    )(x2d, y2d)
    return out[:, 0]


# ---------------------------------------------------------------------------
# Module
# ---------------------------------------------------------------------------
class Similarity:
    """JAX/Pallas port of SNCSE `Similarity`: CosineSimilarity(dim=-1)(x, y) / temp."""

    def __init__(self, temp):
        self.temp = float(temp)

    def __call__(self, x, y):
        x = jnp.asarray(x)
        y = jnp.asarray(y)
        H = x.shape[-1]
        assert y.shape[-1] == H, "last dims must match for cosine similarity"
        bshape = jnp.broadcast_shapes(x.shape[:-1], y.shape[:-1])

        # Fast path (SimCSE in-batch sims): x=(A,1,H), y=(1,B,H) -> (A,B).
        # Normalized matmul on the MXU; never materializes the (A,B,H) broadcast.
        if x.ndim == 3 and y.ndim == 3 and x.shape[1] == 1 and y.shape[0] == 1:
            sim = _cosine_similarity_matrix(x[:, 0, :], y[0], self.temp)
            return sim.reshape(bshape)

        # General path: row-wise cosine similarity (no upcast, no padding).
        if x.shape != y.shape:
            # TODO(synk): express general (non outer-product) broadcasting via
            # BlockSpec index_maps instead of materializing it; rare in SNCSE.
            x = jnp.broadcast_to(x, bshape + (H,))
            y = jnp.broadcast_to(y, bshape + (H,))
        M = math.prod(bshape) if bshape else 1
        sim = _cosine_similarity_rows(x.reshape(M, H), y.reshape(M, H), self.temp)
        return sim.reshape(bshape)

    # torch-style alias
    forward = __call__


# ---------------------------------------------------------------------------
# Reference + self-test
# ---------------------------------------------------------------------------
def _reference(x, y, temp):
    x = x.astype(jnp.float32)
    y = y.astype(jnp.float32)
    dot = jnp.sum(x * y, axis=-1)
    nx = jnp.sqrt(jnp.sum(x * x, axis=-1))
    ny = jnp.sqrt(jnp.sum(y * y, axis=-1))
    return dot / (jnp.maximum(nx, _EPS) * jnp.maximum(ny, _EPS)) / temp


if __name__ == "__main__":
    key = jax.random.PRNGKey(0)
    k1, k2 = jax.random.split(key)

    B, H = 8, 32
    temp = 0.05
    z1 = jax.random.normal(k1, (B, H), dtype=jnp.float32)
    z2 = jax.random.normal(k2, (B, H), dtype=jnp.float32)

    sim_mod = Similarity(temp)

    # 1) SimCSE usage: (B,1,H) vs (1,B,H) -> (B,B) via the MXU fast path.
    out_mat = jax.block_until_ready(sim_mod(z1[:, None, :], z2[None, :, :]))
    ref_mat = _reference(z1[:, None, :], z2[None, :, :], temp)
    assert out_mat.shape == (B, B)
    # MXU f32-matmul decomposition precision varies by chip; modest tolerance.
    assert jnp.allclose(out_mat, ref_mat, atol=5e-2, rtol=1e-2), float(
        jnp.max(jnp.abs(out_mat - ref_mat))
    )

    # 2) Same-shape usage: (B,H) vs (B,H) -> (B,) via the row-wise path.
    out_row = jax.block_until_ready(sim_mod(z1, z2))
    ref_row = _reference(z1, z2, temp)
    assert out_row.shape == (B,)
    assert jnp.allclose(out_row, ref_row, atol=1e-4, rtol=1e-4), float(
        jnp.max(jnp.abs(out_row - ref_row))
    )

    print("KERNEL_OK")
</pallas_src>

<mosaic_0001>
module attributes {stable_mosaic.version = 11 : i64} {
  func.func @_cos_matrix_kernel(%arg0: i32, %arg1: i32, %arg2: memref<8x32xf32, #tpu.memory_space<vmem>>, %arg3: memref<8x32xf32, #tpu.memory_space<vmem>>, %arg4: memref<8x8xf32, #tpu.memory_space<vmem>>) attributes {dimension_semantics = [#tpu.dimension_semantics<parallel>, #tpu.dimension_semantics<parallel>], iteration_bounds = array<i64: 1, 1>, scalar_prefetch = 0 : i64, scratch_operands = 0 : i64, tpu.core_type = #tpu.core_type<tc>, window_params = [{transform_indices = @transform_0, window_bounds = array<i64: 8, 32>}, {transform_indices = @transform_1, window_bounds = array<i64: 8, 32>}, {transform_indices = @transform_2, window_bounds = array<i64: 8, 8>}]} {
    %c0 = arith.constant 0 : index
    %c0_0 = arith.constant 0 : index
    %0 = vector.load %arg2[%c0, %c0_0] : memref<8x32xf32, #tpu.memory_space<vmem>>, vector<8x32xf32>
    %c0_1 = arith.constant 0 : index
    %c0_2 = arith.constant 0 : index
    %1 = vector.load %arg3[%c0_1, %c0_2] : memref<8x32xf32, #tpu.memory_space<vmem>>, vector<8x32xf32>
    %2 = arith.mulf %0, %0 : vector<8x32xf32>
    %cst = arith.constant dense<0.000000e+00> : vector<8xf32>
    %3 = vector.multi_reduction <add>, %2, %cst [1] : vector<8x32xf32> to vector<8xf32>
    %4 = vector.shape_cast %3 : vector<8xf32> to vector<8x1xf32>
    %5 = math.rsqrt %4 : vector<8x1xf32>
    %cst_3 = arith.constant 1.000000e+08 : f32
    %6 = vector.broadcast %cst_3 : f32 to vector<8x1xf32>
    %7 = arith.minimumf %5, %6 : vector<8x1xf32>
    %8 = arith.mulf %1, %1 : vector<8x32xf32>
    %cst_4 = arith.constant dense<0.000000e+00> : vector<8xf32>
    %9 = vector.multi_reduction <add>, %8, %cst_4 [1] : vector<8x32xf32> to vector<8xf32>
    %10 = vector.shape_cast %9 : vector<8xf32> to vector<8x1xf32>
    %11 = math.rsqrt %10 : vector<8x1xf32>
    %cst_5 = arith.constant 1.000000e+08 : f32
    %12 = vector.broadcast %cst_5 : f32 to vector<8x1xf32>
    %13 = arith.minimumf %11, %12 : vector<8x1xf32>
    %14 = vector.broadcast %7 : vector<8x1xf32> to vector<8x32xf32>
    %15 = arith.mulf %0, %14 : vector<8x32xf32>
    %16 = vector.broadcast %13 : vector<8x1xf32> to vector<8x32xf32>
    %17 = arith.mulf %1, %16 : vector<8x32xf32>
    %cst_6 = arith.constant dense<0.000000e+00> : vector<8x8xf32>
    %18 = tpu.matmul %15, %17, %cst_6 {dimension_numbers = #tpu.dot_dimension_numbers<[1], [1], [0], [0], [0, 0, 1, 0], [], []>} : vector<8x32xf32>, vector<8x32xf32>, vector<8x8xf32> -> vector<8x8xf32>
    %cst_7 = arith.constant 2.000000e+01 : f32
    %19 = vector.broadcast %cst_7 : f32 to vector<8x8xf32>
    %20 = arith.mulf %18, %19 : vector<8x8xf32>
    %c0_8 = arith.constant 0 : index
    %c0_9 = arith.constant 0 : index
    %21 = vector.load %arg4[%c0_8, %c0_9] : memref<8x8xf32, #tpu.memory_space<vmem>>, vector<8x8xf32>
    tpu.vector_store %arg4[%c0_8, %c0_9], %20 {strides = array<i32>} : memref<8x8xf32, #tpu.memory_space<vmem>>, vector<8x8xf32>,
    return
  }
  func.func @transform_0(%arg0: i32, %arg1: i32) -> (i32, i32) {
    %c0_i32 = arith.constant 0 : i32
    %c0_i32_0 = arith.constant 0 : i32
    return %arg0, %c0_i32 : i32, i32
  }
  func.func @transform_1(%arg0: i32, %arg1: i32) -> (i32, i32) {
    %c0_i32 = arith.constant 0 : i32
    %c0_i32_0 = arith.constant 0 : i32
    return %arg1, %c0_i32 : i32, i32
  }
  func.func @transform_2(%arg0: i32, %arg1: i32) -> (i32, i32) {
    %c0_i32 = arith.constant 0 : i32
    return %arg0, %arg1 : i32, i32
  }
}

</mosaic_0001>

<llo_original>
// kernel: tpu_custom_call.1
$region0: #{tpu_custom_call.1}
  #allocation0 [shape = 'u32[]', space=smem, size = 0x4, offset = 0x4, fixed_abs, tag = 'smem constant byte address 0x4 - core index']
  #allocation1 [shape = 'u32[144,128]{1,0:T(1,128)}', space=vmem, size = 0x12000, scoped, tag = 'internal scratch']
  %s0 = inlined_call_operand.hbm [shape: f32[8,32], index: 0, kind: input, shape index: {}]
  %s1 = inlined_call_operand.hbm [shape: f32[8,32], index: 1, kind: input, shape index: {}]
  %s2 = inlined_call_operand.hbm [shape: f32[8,8], index: 2, kind: output, shape index: {}]
  %s3 = sld [smem:[#allocation0]]
  $region26: #{tpu_custom_call.1} parent=0
    _
  %s5 = ssub.s32 1, %s3
  %s6 = scalar_select 0, %s5, %s3
  $region1: #{tpu_custom_call.1} parent=0
    #allocation2 [shape = 'u8[4096]{0}', space=vmem, size = 0x1000, scoped, tag = 'input window, operand 0, single buffered']
    #allocation3 [shape = 's32[1]{0}', space=sflag, size = 0x4, scoped, tag = 'scoped memory for tpu_custom_call.1']
    #allocation4 [shape = 's32[1]{0}', space=sflag, size = 0x4, scoped, tag = 'scoped memory for tpu_custom_call.1']
    #allocation5 [shape = 'u8[4096]{0}', space=vmem, size = 0x1000, scoped, tag = 'input window, operand 1, single buffered']
    #allocation6 [shape = 's32[1]{0}', space=sflag, size = 0x4, scoped, tag = 'scoped memory for tpu_custom_call.1']
    #allocation7 [shape = 'u8[4096]{0}', space=vmem, size = 0x1000, scoped, tag = 'output window, operand 0, single buffered']
    %7 = vsyncpa [#allocation3], 0
    %8 = vsyncpa [#allocation6], 0
    %9 = vsyncpa [#allocation4], 0
    // Predicated region
    $region2: #{tpu_custom_call.1} parent=1 // pred_check
      _
    $region3: #{tpu_custom_call.1} parent=1 // pred_check_branch
      %11 = sbr.rel (0) target = $region5
    $region4: #{tpu_custom_call.1} parent=1 // pred_region
      %s13 = ssub.s32 128, 128
      %14 = vsyncadd [#allocation3], %s13
      %s16 = sshll.u32 [#allocation2], 4
      %s17 = int_to_ptr.vmem [resolvable:$true] %s16
      %19 = dma.hbm_to_vmem [thread:$0]  %s0, 128, %s17, [#allocation3]
    $region5: #{tpu_custom_call.1} parent=1 // pred_fallthru
      _
    // Predicated region
    $region6: #{tpu_custom_call.1} parent=1 // pred_check
      _
    $region7: #{tpu_custom_call.1} parent=1 // pred_check_branch
      %21 = sbr.rel (0) target = $region9
    $region8: #{tpu_custom_call.1} parent=1 // pred_region
      %s23 = ssub.s32 128, 128
      %24 = vsyncadd [#allocation6], %s23
      %s26 = sshll.u32 [#allocation5], 4
      %s27 = int_to_ptr.vmem [resolvable:$true] %s26
      %29 = dma.hbm_to_vmem [thread:$0]  %s1, 128, %s27, [#allocation6]
    $region9: #{tpu_custom_call.1} parent=1 // pred_fallthru
      _
    // Predicated region
    $region10: #{tpu_custom_call.1} parent=1 // pred_check
      _
    $region11: #{tpu_custom_call.1} parent=1 // pred_check_branch
      %31 = sbr.rel (0) target = $region13
    $region12: #{tpu_custom_call.1} parent=1 // pred_region
      %32 = dma.done [#allocation3], 128
    $region13: #{tpu_custom_call.1} parent=1 // pred_fallthru
      _
    // Predicated region
    $region14: #{tpu_custom_call.1} parent=1 // pred_check
      _
    $region15: #{tpu_custom_call.1} parent=1 // pred_check_branch
      %34 = sbr.rel (0) target = $region17
    $region16: #{tpu_custom_call.1} parent=1 // pred_region
      %35 = dma.done [#allocation6], 128
    $region17: #{tpu_custom_call.1} parent=1 // pred_fallthru
      _
    %v36 = vld [vmem:[#allocation2] sm:$0xff]
    %v37 = vld [vmem:[#allocation5] sm:$0xff]
    %v38 = vmul.f32 %v36, %v36
    %vm39 = vcmask 261120
    %v40 = vsel %vm39, %v38, 0.0
    %41 = vadd.xlane.f32.xlu0 %v40
    %v42 = vpop.xlane.xlu0 %41
    %v43 = vrsqrt.pop %v42
    %v44 = vmin.f32 %v43, 1e+08
    %v45 = vmul.f32 %v37, %v37
    %v46 = vsel %vm39, %v45, 0.0
    %47 = vadd.xlane.f32.xlu0 %v46
    %v48 = vpop.xlane.xlu0 %47
    %v49 = vrsqrt.pop %v48
    %v50 = vmin.f32 %v49, 1e+08
    %v51 = vmul.f32 %v36, %v44
    %v52 = vmul.f32 %v37, %v50
    %v54 = vsel %vm39, %v51, 0
    %v57 = vsel %vm39, %v52, 0
    %59 = vmatprep.subr.mxu0 0.0
    %60 = vmatpush1.xpose.msra.mxu0 %v57
    %61 = vmatprep.subr.mxu0 0.0
    %62 = vmatpush1.xpose.msra.mxu0 0.0
    %63 = vmatprep.subr.mxu0 0.0
    %64 = vmatpush1.xpose.msra.mxu0 0.0
    %65 = vmatprep.subr.mxu0 0.0
    %66 = vmatpush1.xpose.msra.mxu0 0.0
    %67 = vmatprep.subr.mxu0 0.0
    %68 = vmatpush1.xpose.msra.mxu0 0.0
    %69 = vmatprep.subr.mxu0 0.0
    %70 = vmatpush1.xpose.msra.mxu0 0.0
    %71 = vmatprep.subr.mxu0 0.0
    %72 = vmatpush1.xpose.msra.mxu0 0.0
    %73 = vmatprep.subr.mxu0 0.0
    %74 = vmatpush1.xpose.msra.mxu0 0.0
    %75 = vmatprep.subr.mxu0 0.0
    %76 = vmatpush1.xpose.msra.mxu0 0.0
    %77 = vmatprep.subr.mxu0 0.0
    %78 = vmatpush1.xpose.msra.mxu0 0.0
    %79 = vmatprep.subr.mxu0 0.0
    %80 = vmatpush1.xpose.msra.mxu0 0.0
    %81 = vmatprep.subr.mxu0 0.0
    %82 = vmatpush1.xpose.msra.mxu0 0.0
    %83 = vmatprep.subr.mxu0 0.0
    %84 = vmatpush1.xpose.msra.mxu0 0.0
    %85 = vmatprep.subr.mxu0 0.0
    %86 = vmatpush1.xpose.msra.mxu0 0.0
    %87 = vmatprep.subr.mxu0 0.0
    %88 = vmatpush1.xpose.msra.mxu0 0.0
    %89 = vmatprep.subr.mxu0 0.0
    %90 = vmatpush1.xpose.msra.mxu0 0.0
    %91 = vmatprep.subr.mxu0 0.0
    %92 = vmatpush1.xpose.msra.mxu0 0.0
    %93 = vmatprep.subr.mxu0 0.0
    %94 = vmatpush1.xpose.msra.mxu0 0.0
    %95 = vmatprep.subr.mxu0 0.0
    %96 = vmatpush1.xpose.msra.mxu0 0.0
    %97 = vmatprep.subr.mxu0 0.0
    %98 = vmatpush1.xpose.msra.mxu0 0.0
    %99 = vmatprep.subr.mxu0 0.0
    %100 = vmatpush1.xpose.msra.mxu0 0.0
    %101 = vmatprep.subr.mxu0 0.0
    %102 = vmatpush1.xpose.msra.mxu0 0.0
    %103 = vmatprep.subr.mxu0 0.0
    %104 = vmatpush1.xpose.msra.mxu0 0.0
    %105 = vmatprep.subr.mxu0 0.0
    %106 = vmatpush1.xpose.msra.mxu0 0.0
    %107 = vmatprep.subr.mxu0 0.0
    %108 = vmatpush1.xpose.msra.mxu0 0.0
    %109 = vmatprep.subr.mxu0 0.0
    %110 = vmatpush1.xpose.msra.mxu0 0.0
    %111 = vmatprep.subr.mxu0 0.0
    %112 = vmatpush1.xpose.msra.mxu0 0.0
    %113 = vmatprep.subr.mxu0 0.0
    %114 = vmatpush1.xpose.msra.mxu0 0.0
    %115 = vmatprep.subr.mxu0 0.0
    %116 = vmatpush1.xpose.msra.mxu0 0.0
    %117 = vmatprep.subr.mxu0 0.0
    %118 = vmatpush1.xpose.msra.mxu0 0.0
    %119 = vmatprep.subr.mxu0 0.0
    %120 = vmatpush1.xpose.msra.mxu0 0.0
    %121 = vmatprep.subr.mxu0 0.0
    %122 = vmatpush1.xpose.msra.mxu0 0.0
    %123 = vmatprep.mubr.f32.mxu0 0.0
    %124 = vmatmul.mubr.f32.gmra.mrb[0].mxu0 %v54
    %v125 = vpop.f32.mrb[0].mxu0
    %v126 = vadd.f32 0.0, %v125
    %v127 = vpop.f32.mrb[0].mxu0
    %128 = vdwg.mxu0
    %v129 = vmul.f32 %v126, 20.0
    %vm130 = vcmask 64512
    %131 = vst.msk [vmem:[#allocation7] sm:$0xff] %vm130, %v129
    // Predicated region
    $region18: #{tpu_custom_call.1} parent=1 // pred_check
      _
    $region19: #{tpu_custom_call.1} parent=1 // pred_check_branch
      %133 = sbr.rel (0) target = $region21
    $region20: #{tpu_custom_call.1} parent=1 // pred_region
      %s135 = ssub.s32 128, 128
      %136 = vsyncadd [#allocation4], %s135
      %s138 = sshll.u32 [#allocation7], 4
      %s139 = int_to_ptr.vmem [resolvable:$true] %s138
      %141 = dma.vmem_to_hbm [thread:$0]  %s139, 128, %s2, [#allocation4]
    $region21: #{tpu_custom_call.1} parent=1 // pred_fallthru
      _
    // Predicated region
    $region22: #{tpu_custom_call.1} parent=1 // pred_check
      _
    $region23: #{tpu_custom_call.1} parent=1 // pred_check_branch
      %143 = sbr.rel (0) target = $region25
    $region24: #{tpu_custom_call.1} parent=1 // pred_region
      %144 = dma.done [#allocation4], 128
    $region25: #{tpu_custom_call.1} parent=1 // pred_fallthru
      _
    %145 = vsyncpa [#allocation3], 1
    %146 = vsyncpa [#allocation6], 1
    %147 = vsyncpa [#allocation4], 1

</llo_original>
